<compile_context>
chip_gen: v5e
topology: v5e:2x2
jax: 0.10.0
libtpu: 0.0.40
codegen_flags: <defaults>
</compile_context>

<pallas_src>
import functools

import jax
import jax.numpy as jnp
from jax.experimental import pallas as pl
from jax.experimental.pallas import tpu as pltpu


def _round_up(x, m):
    return (x + m - 1) // m * m


def _cdiv(a, b):
    return (a + b - 1) // b


def _pairwise_sum(parts):
    """Tree-fold a list of equal-shaped arrays with plain VPU adds."""
    while len(parts) > 1:
        nxt = []
        for a in range(0, len(parts) - 1, 2):
            nxt.append(parts[a] + parts[a + 1])
        if len(parts) % 2 == 1:
            nxt.append(parts[-1])
        parts = nxt
    return parts[0]


def _vmem_capacity_bytes():
    """Per-core VMEM capacity; 64 MiB on v7x, 128 MiB on v5e/v6e."""
    try:
        cap = getattr(pltpu.get_tpu_info(), "vmem_capacity_bytes", None)
        if cap:
            return int(cap)
    except Exception:
        pass
    try:
        kind = jax.devices()[0].device_kind.lower()
    except Exception:
        kind = ""
    return (64 << 20) if ("v7" in kind or "7x" in kind) else (128 << 20)


def _default_exp_in_bf16():
    """bf16 EUP exists on v6e/v7x; keep f32 exp on v5e and older."""
    try:
        kind = jax.devices()[0].device_kind.lower()
    except Exception:
        return False
    return ("v6" in kind) or ("v7" in kind) or ("7x" in kind)


def _kd_kernel(s_ref, t_ref, o_ref, *, inv_temp, n_valid, tile_rows,
               need_mask, exp_in_bf16):
    s = s_ref[...].astype(jnp.float32) * inv_temp
    t = t_ref[...].astype(jnp.float32) * inv_temp

    # Stable log-softmax / softmax pieces (all reductions are per-row, so
    # garbage rows of a partial last block never contaminate valid rows).
    s_shift = s - jnp.max(s, axis=-1, keepdims=True)
    t_shift = t - jnp.max(t, axis=-1, keepdims=True)

    if exp_in_bf16:
        # Arguments are <= 0 after the max shift; sums stay f32.
        e_s = jnp.exp(s_shift.astype(jnp.bfloat16)).astype(jnp.float32)
        e_t = jnp.exp(t_shift.astype(jnp.bfloat16)).astype(jnp.float32)
    else:
        e_s = jnp.exp(s_shift)
        e_t = jnp.exp(t_shift)

    # Per-row:  sum_c(T * logS) = inv_sum_t * sum_c(e_t * s_shift) - log_z
    log_z = jnp.log(jnp.sum(e_s, axis=-1, keepdims=True))               # (tile, 1)
    inv_sum_t = pl.reciprocal(jnp.sum(e_t, axis=-1, keepdims=True),
                              approx=True)                              # (tile, 1)
    a = jnp.sum(e_t * s_shift, axis=-1, keepdims=True)                  # (tile, 1)

    row = inv_sum_t * a - log_z                                         # (tile, 1)

    if need_mask:
        # Row mask at (tile, 1) granularity only (no (tile, C) select).
        i = pl.program_id(0)
        r_idx = jax.lax.broadcasted_iota(jnp.int32, (tile_rows, 1), 0)
        row = jnp.where(i * tile_rows + r_idx < n_valid, row, 0.0)

    # Fold rows to an (8, 1) partial per tile with VPU adds; the tiny
    # cross-tile sum + scale happens outside the kernel.
    o_ref[...] = _pairwise_sum(
        [row[g * 8:(g + 1) * 8, :] for g in range(tile_rows // 8)])


def kd_loss(logit_s, logit_t, *, temp=4.0, alpha=0.5, exp_in_bf16=None):
    """Returns (1 - alpha, kd_loss) matching the PyTorch KDLoss.forward."""
    N, C = logit_s.shape
    assert logit_t.shape == (N, C)

    if exp_in_bf16 is None:
        exp_in_bf16 = _default_exp_in_bf16()

    itemsize = jnp.dtype(logit_s.dtype).itemsize
    row_align = 8 if itemsize >= 4 else 16   # (8,128) f32 / (16,128) bf16 tiles
    c_pad = _round_up(C, 128)                # VMEM footprint only; no HBM pad.

    cap = _vmem_capacity_bytes()
    # ~70% of per-core VMEM for pipelined blocks + temporaries, with a hard
    # 24 MiB of headroom (v7x: ~40 MiB budget, v5e/v6e: ~90 MiB).
    budget = max(16 << 20, min(int(cap * 0.7), cap - (24 << 20)))

    # Live set: 2 inputs x 2 pipeline buffers (input dtype) + ~7 f32 (tile, C)
    # temporaries (conservative; the refactored kernel peaks below that).
    n_f32_tmps = 7
    per_row_bytes = c_pad * (4 * itemsize + n_f32_tmps * 4)
    # TODO(synk): for very large C (LLM vocab distillation, C >= ~256k f32)
    # even a row_align-row tile exceeds v7x's 64 MiB VMEM; add a second
    # "arbitrary" grid axis over class chunks with an online max/logsumexp.
    max_rows = max(row_align, (budget // per_row_bytes) // row_align * row_align)
    tile_rows = min(1024, max_rows, _round_up(N, row_align))
    # Keep >= ~4 grid steps when N permits so both v7x TensorCores get work
    # ("parallel" grid sharding) and the input pipeline double-buffers.
    tile_rows = min(tile_rows, max(row_align, _round_up(_cdiv(N, 4), row_align)))

    n_tiles = _cdiv(N, tile_rows)
    need_mask = (N % tile_rows) != 0

    block_in_bytes = tile_rows * c_pad * itemsize
    vmem_need = 4 * block_in_bytes + tile_rows * c_pad * 4 * n_f32_tmps + (1 << 20)
    vmem_limit = int(max(32 << 20, min(cap - (8 << 20), vmem_need + (8 << 20))))

    kernel = functools.partial(
        _kd_kernel,
        inv_temp=1.0 / float(temp),
        n_valid=N,
        tile_rows=tile_rows,
        need_mask=need_mask,
        exp_in_bf16=bool(exp_in_bf16),
    )

    partials = pl.pallas_call(
        kernel,
        out_shape=jax.ShapeDtypeStruct((n_tiles * 8, 1), jnp.float32),
        grid_spec=pltpu.PrefetchScalarGridSpec(
            num_scalar_prefetch=0,
            grid=(n_tiles,),
            in_specs=[
                pl.BlockSpec((tile_rows, C), lambda i: (i, 0)),
                pl.BlockSpec((tile_rows, C), lambda i: (i, 0)),
            ],
            out_specs=pl.BlockSpec((8, 1), lambda i: (i, 0)),
        ),
        compiler_params=pltpu.CompilerParams(
            dimension_semantics=("parallel",),
            vmem_limit_bytes=vmem_limit,
        ),
    )(logit_s, logit_t)

    kd = (-float(alpha) * float(temp) ** 2 / N) * jnp.sum(partials)
    return (1.0 - float(alpha), kd)


def _kd_loss_ref(logit_s, logit_t, temp=4.0, alpha=0.5):
    S_i = jax.nn.softmax(logit_s / temp, axis=1)
    T_i = jax.nn.softmax(logit_t / temp, axis=1)
    return -alpha * temp ** 2 * jnp.mean(jnp.sum(T_i * jnp.log(S_i), axis=1))


if __name__ == "__main__":
    key = jax.random.PRNGKey(0)
    k1, k2 = jax.random.split(key)

    # Small class-logit batches: aligned, row-remainder + unaligned classes,
    # and tiny unaligned classes with an exact row split.
    for (N, C) in [(8, 128), (10, 200), (16, 37)]:
        logit_s = jax.random.normal(k1, (N, C), dtype=jnp.float32) * 3.0
        logit_t = jax.random.normal(k2, (N, C), dtype=jnp.float32) * 3.0

        ref = _kd_loss_ref(logit_s, logit_t, temp=4.0, alpha=0.5)

        # f32-exp path (tight-ish; approx reciprocal is the only deviation).
        coeff, loss = kd_loss(logit_s, logit_t, temp=4.0, alpha=0.5,
                              exp_in_bf16=False)
        loss = jax.block_until_ready(loss)
        assert abs(coeff - 0.5) < 1e-6
        assert jnp.allclose(loss, ref, rtol=1e-2, atol=1e-2), (N, C, loss, ref)

        # Chip-default path (bf16 exp on v6e/v7x): looser tolerance.
        coeff2, loss2 = kd_loss(logit_s, logit_t, temp=4.0, alpha=0.5)
        loss2 = jax.block_until_ready(loss2)
        assert abs(coeff2 - 0.5) < 1e-6
        assert jnp.allclose(loss2, ref, rtol=3e-2, atol=3e-2), (N, C, loss2, ref)

    print("KERNEL_OK")
</pallas_src>

<mosaic_0001>
module attributes {stable_mosaic.version = 11 : i64} {
  func.func @_kd_kernel(%arg0: i32, %arg1: memref<8x128xf32, #tpu.memory_space<vmem>>, %arg2: memref<8x128xf32, #tpu.memory_space<vmem>>, %arg3: memref<8x1xf32, #tpu.memory_space<vmem>>) attributes {dimension_semantics = [#tpu.dimension_semantics<parallel>], iteration_bounds = array<i64: 1>, scalar_prefetch = 0 : i64, scratch_operands = 0 : i64, tpu.core_type = #tpu.core_type<tc>, window_params = [{transform_indices = @transform_0, window_bounds = array<i64: 8, 128>}, {transform_indices = @transform_1, window_bounds = array<i64: 8, 128>}, {transform_indices = @transform_2, window_bounds = array<i64: 8, 1>}]} {
    %c0 = arith.constant 0 : index
    %c0_0 = arith.constant 0 : index
    %0 = vector.load %arg1[%c0, %c0_0] : memref<8x128xf32, #tpu.memory_space<vmem>>, vector<8x128xf32>
    %cst = arith.constant 2.500000e-01 : f32
    %1 = vector.broadcast %cst : f32 to vector<8x128xf32>
    %2 = arith.mulf %0, %1 : vector<8x128xf32>
    %c0_1 = arith.constant 0 : index
    %c0_2 = arith.constant 0 : index
    %3 = vector.load %arg2[%c0_1, %c0_2] : memref<8x128xf32, #tpu.memory_space<vmem>>, vector<8x128xf32>
    %cst_3 = arith.constant 2.500000e-01 : f32
    %4 = vector.broadcast %cst_3 : f32 to vector<8x128xf32>
    %5 = arith.mulf %3, %4 : vector<8x128xf32>
    %cst_4 = arith.constant dense<0xFF800000> : vector<8xf32>
    %6 = vector.multi_reduction <maximumf>, %2, %cst_4 [1] : vector<8x128xf32> to vector<8xf32>
    %7 = vector.shape_cast %6 : vector<8xf32> to vector<8x1xf32>
    %8 = vector.broadcast %7 : vector<8x1xf32> to vector<8x128xf32>
    %9 = arith.subf %2, %8 : vector<8x128xf32>
    %cst_5 = arith.constant dense<0xFF800000> : vector<8xf32>
    %10 = vector.multi_reduction <maximumf>, %5, %cst_5 [1] : vector<8x128xf32> to vector<8xf32>
    %11 = vector.shape_cast %10 : vector<8xf32> to vector<8x1xf32>
    %12 = vector.broadcast %11 : vector<8x1xf32> to vector<8x128xf32>
    %13 = arith.subf %5, %12 : vector<8x128xf32>
    %14 = math.exp %9 : vector<8x128xf32>
    %15 = math.exp %13 : vector<8x128xf32>
    %cst_6 = arith.constant dense<0.000000e+00> : vector<8xf32>
    %16 = vector.multi_reduction <add>, %14, %cst_6 [1] : vector<8x128xf32> to vector<8xf32>
    %17 = vector.shape_cast %16 : vector<8xf32> to vector<8x1xf32>
    %18 = math.log %17 : vector<8x1xf32>
    %cst_7 = arith.constant dense<0.000000e+00> : vector<8xf32>
    %19 = vector.multi_reduction <add>, %15, %cst_7 [1] : vector<8x128xf32> to vector<8xf32>
    %20 = vector.shape_cast %19 : vector<8xf32> to vector<8x1xf32>
    %21 = tpu.reciprocal %20 {approx = true} : vector<8x1xf32> -> vector<8x1xf32>
    %22 = arith.mulf %15, %9 : vector<8x128xf32>
    %cst_8 = arith.constant dense<0.000000e+00> : vector<8xf32>
    %23 = vector.multi_reduction <add>, %22, %cst_8 [1] : vector<8x128xf32> to vector<8xf32>
    %24 = vector.shape_cast %23 : vector<8xf32> to vector<8x1xf32>
    %25 = arith.mulf %21, %24 : vector<8x1xf32>
    %26 = arith.subf %25, %18 : vector<8x1xf32>
    %c0_9 = arith.constant 0 : index
    %c0_10 = arith.constant 0 : index
    %27 = vector.load %arg3[%c0_9, %c0_10] : memref<8x1xf32, #tpu.memory_space<vmem>>, vector<8x1xf32>
    tpu.vector_store %arg3[%c0_9, %c0_10], %26 {strides = array<i32>} : memref<8x1xf32, #tpu.memory_space<vmem>>, vector<8x1xf32>,
    return
  }
  func.func @transform_0(%arg0: i32) -> (i32, i32) {
    %c0_i32 = arith.constant 0 : i32
    %c0_i32_0 = arith.constant 0 : i32
    return %arg0, %c0_i32 : i32, i32
  }
  func.func @transform_1(%arg0: i32) -> (i32, i32) {
    %c0_i32 = arith.constant 0 : i32
    %c0_i32_0 = arith.constant 0 : i32
    return %arg0, %c0_i32 : i32, i32
  }
  func.func @transform_2(%arg0: i32) -> (i32, i32) {
    %c0_i32 = arith.constant 0 : i32
    %c0_i32_0 = arith.constant 0 : i32
    return %arg0, %c0_i32 : i32, i32
  }
}

</mosaic_0001>

<llo_original>
// kernel: tpu_custom_call.1
$region0: #{tpu_custom_call.1}
  #allocation0 [shape = 'u32[]', space=smem, size = 0x4, offset = 0x4, fixed_abs, tag = 'smem constant byte address 0x4 - core index']
  #allocation1 [shape = 'u32[72,128]{1,0:T(1,128)}', space=vmem, size = 0x9000, scoped, tag = 'internal scratch']
  %s0 = inlined_call_operand.hbm [shape: f32[8,128], index: 0, kind: input, shape index: {}]
  %s1 = inlined_call_operand.hbm [shape: f32[8,128], index: 1, kind: input, shape index: {}]
  %s2 = inlined_call_operand.vmem [shape: f32[8,1], index: 2, kind: output, shape index: {}]
  %s3 = sld [smem:[#allocation0]]
  $region26: #{tpu_custom_call.1} parent=0
    _
  %s5 = ssub.s32 1, %s3
  %s6 = scalar_select 0, %s5, %s3
  $region1: #{tpu_custom_call.1} parent=0
    #allocation2 [shape = 'u8[4096]{0}', space=vmem, size = 0x1000, scoped, tag = 'input window, operand 0, single buffered']
    #allocation3 [shape = 's32[1]{0}', space=sflag, size = 0x4, scoped, tag = 'scoped memory for tpu_custom_call.1']
    #allocation4 [shape = 'u8[4096]{0}', space=vmem, size = 0x1000, scoped, tag = 'input window, operand 1, single buffered']
    #allocation5 [shape = 's32[1]{0}', space=sflag, size = 0x4, scoped, tag = 'scoped memory for tpu_custom_call.1']
    %7 = vsyncpa [#allocation3], 0
    %8 = vsyncpa [#allocation5], 0
    // Predicated region
    $region2: #{tpu_custom_call.1} parent=1 // pred_check
      _
    $region3: #{tpu_custom_call.1} parent=1 // pred_check_branch
      %10 = sbr.rel (0) target = $region5
    $region4: #{tpu_custom_call.1} parent=1 // pred_region
      %12 = vsyncadd [#allocation3], 0
      %s14 = sshll.u32 %s0, 4
      %s15 = int_to_ptr.hbm [resolvable:$true] %s14
      %s16 = sshll.u32 [#allocation2], 4
      %s17 = int_to_ptr.vmem [resolvable:$true] %s16
      %19 = dma.hbm_to_vmem [thread:$0]  %s15, 128, %s17, [#allocation3]
    $region5: #{tpu_custom_call.1} parent=1 // pred_fallthru
      _
    // Predicated region
    $region6: #{tpu_custom_call.1} parent=1 // pred_check
      _
    $region7: #{tpu_custom_call.1} parent=1 // pred_check_branch
      %21 = sbr.rel (0) target = $region9
    $region8: #{tpu_custom_call.1} parent=1 // pred_region
      %23 = vsyncadd [#allocation5], 0
      %s25 = sshll.u32 %s1, 4
      %s26 = int_to_ptr.hbm [resolvable:$true] %s25
      %s27 = sshll.u32 [#allocation4], 4
      %s28 = int_to_ptr.vmem [resolvable:$true] %s27
      %30 = dma.hbm_to_vmem [thread:$0]  %s26, 128, %s28, [#allocation5]
    $region9: #{tpu_custom_call.1} parent=1 // pred_fallthru
      _
    // Predicated region
    $region10: #{tpu_custom_call.1} parent=1 // pred_check
      _
    $region11: #{tpu_custom_call.1} parent=1 // pred_check_branch
      %32 = sbr.rel (0) target = $region13
    $region12: #{tpu_custom_call.1} parent=1 // pred_region
      %34 = dma.done [#allocation3], 128
    $region13: #{tpu_custom_call.1} parent=1 // pred_fallthru
      _
    // Predicated region
    $region14: #{tpu_custom_call.1} parent=1 // pred_check
      _
    $region15: #{tpu_custom_call.1} parent=1 // pred_check_branch
      %36 = sbr.rel (0) target = $region17
    $region16: #{tpu_custom_call.1} parent=1 // pred_region
      %38 = dma.done [#allocation5], 128
    $region17: #{tpu_custom_call.1} parent=1 // pred_fallthru
      _
    %v39 = vld [vmem:[#allocation2] sm:$0xff]
    %v40 = vmul.f32 %v39, 0.25
    %v41 = vld [vmem:[#allocation4] sm:$0xff]
    %v42 = vmul.f32 %v41, 0.25
    %43 = vmax.xlane.f32.xlu0 %v40
    %v44 = vpop.xlane.xlu0 %43
    %v45 = vsub.f32 %v40, %v44
    %46 = vmax.xlane.f32.xlu0 %v42
    %v47 = vpop.xlane.xlu0 %46
    %v48 = vsub.f32 %v42, %v47
    %v49 = vmul.f32 %v45, 1.442695
    %v50 = vpow.pop %v49
    %v51 = vmul.f32 %v48, 1.442695
    %v52 = vpow.pop %v51
    %53 = vadd.xlane.f32.xlu0 %v50
    %v54 = vpop.xlane.xlu0 %53
    %v55 = vlog2.pop %v54
    %v56 = vmul.f32 %v55, 0.6931472
    %57 = vadd.xlane.f32.xlu0 %v52
    %v58 = vpop.xlane.xlu0 %57
    %v59 = vrcp.pop %v58
    %v60 = vmul.f32 %v52, %v45
    %61 = vadd.xlane.f32.xlu0 %v60
    %v62 = vpop.xlane.xlu0 %61
    %v63 = vmul.f32 %v59, %v62
    %v64 = vsub.f32 %v63, %v56
    %vm65 = vcmask 7168
    %66 = vst.msk [vmem:[%s2] sm:$0xff] %vm65, %v64
    // Predicated region
    $region18: #{tpu_custom_call.1} parent=1 // pred_check
      _
    $region19: #{tpu_custom_call.1} parent=1 // pred_check_branch
      %68 = sbr.rel (0) target = $region21
    $region20: #{tpu_custom_call.1} parent=1 // pred_region
      _
    $region21: #{tpu_custom_call.1} parent=1 // pred_fallthru
      _
    // Predicated region
    $region22: #{tpu_custom_call.1} parent=1 // pred_check
      _
    $region23: #{tpu_custom_call.1} parent=1 // pred_check_branch
      %70 = sbr.rel (0) target = $region25
    $region24: #{tpu_custom_call.1} parent=1 // pred_region
      _
    $region25: #{tpu_custom_call.1} parent=1 // pred_fallthru
      _
    %71 = vsyncpa [#allocation3], 1
    %72 = vsyncpa [#allocation5], 1

</llo_original>
